<compile_context>
chip_gen: v7x
topology: tpu7x:2x2x1
jax: 0.10.0
libtpu: 0.0.40
codegen_flags: <defaults>
</compile_context>

<pallas_src>
import math
import functools

import jax
import jax.numpy as jnp
from jax import lax
from jax.experimental import pallas as pl
from jax.experimental.pallas import tpu as pltpu


def _attention_kernel(x_ref, w_ref, b_ref, out_ref, score_ref, *,
                      seq_len, embed_dim, hidden_dim, out_dim):
    # Block shapes (one grid step = one batch chunk of Bc elements):
    #   x_ref     : (Bc*L, 2E)        [k | q] rows, lane-dense loads
    #   w_ref     : (2E + H, max(2H, O))  [blockdiag(Wk,Wq) ; Wp (zero-padded)]
    #   b_ref     : (1, 2H + O)       [bk | bq | bp]
    #   out_ref   : (Bc*L, O)
    #   score_ref : (Bc*H, H)
    L, E, H, O = seq_len, embed_dim, hidden_dim, out_dim
    NL = x_ref.shape[0]
    Bc = NL // L

    # ---- Fused k/q projection: a single MXU matmul over the whole chunk ----
    #   [k | q] @ blockdiag(Wk^T, Wq^T) + [bk | bq]  ->  [kx | qx]   (NL, 2H)
    wkq = w_ref[0:2 * E, 0:2 * H]
    bkq = b_ref[:, 0:2 * H]
    kq = jnp.dot(x_ref[...], wkq, preferred_element_type=jnp.float32) + bkq
    kx = kq[:, 0:H]
    qx = kq[:, H:2 * H]

    # Batched view for the score / output bmm's (minor dim unchanged; the
    # second-minor split is sublane-aligned given the wrapper asserts).
    kx3 = kx.reshape(Bc, L, H)
    qx3 = qx.reshape(Bc, L, H)

    # score = bmm(kx^T, qx) -> (Bc, H, H): contract the L axis directly with a
    # batch dim instead of materializing kx.T (no XLU transpose).
    s = lax.dot_general(
        kx3, qx3,
        dimension_numbers=(((1,), (1,)), ((0,), (0,))),
        preferred_element_type=jnp.float32)

    # Numerically stable softmax over the last dim (exact divide: cost is
    # negligible here and it keeps parity with the PyTorch reference).
    s = s - jnp.max(s, axis=-1, keepdims=True)
    e = jnp.exp(s)
    p = e / jnp.sum(e, axis=-1, keepdims=True)

    # output = bmm(kx, score) -> (Bc, L, H)
    o3 = lax.dot_general(
        kx3, p,
        dimension_numbers=(((2,), (1,)), ((0,), (0,))),
        preferred_element_type=jnp.float32)

    # output = proj(output) -> (Bc*L, O), fused over the whole chunk.
    # (dropout p=0 == identity)
    wp = w_ref[2 * E:2 * E + H, 0:O]
    bp = b_ref[:, 2 * H:2 * H + O]
    o2 = jnp.dot(o3.reshape(Bc * L, H), wp,
                 preferred_element_type=jnp.float32) + bp

    out_ref[...] = o2.astype(out_ref.dtype)
    score_ref[...] = p.reshape(Bc * H, H).astype(score_ref.dtype)


def attention_forward(k, q, params, *, batch_chunks=1):
    """params = (wk_t, bk, wq_t, bq, wp_t, bp); weights pre-transposed (in, out).

    batch_chunks: number of grid steps along the batch.  Default 1: at tiny
    batches the kernel is launch/DMA bound and a single step is best on all of
    v5e/v6e/v7x.  Only raise it (sizing chunks so Bc*L is ~512-2048 rows) when
    the batch grows enough that per-chunk compute exceeds the ~0.35 us per-step
    overhead and DMA/compute overlap starts to matter.
    """
    if k.ndim == 2:
        k = k[:, None, :]
    if q.ndim == 2:
        q = q[:, None, :]
    mb, k_len, E = k.shape
    q_len = q.shape[1]
    assert q_len == k_len, "torch bmm(kt, qx) in the reference requires q_len == k_len"
    assert mb % batch_chunks == 0, "batch must divide evenly into batch_chunks"
    Bc = mb // batch_chunks
    L = k_len

    wk_t, bk, wq_t, bq, wp_t, bp = params
    H = wk_t.shape[1]
    O = wp_t.shape[1]

    # --- (8,128) lowering / layout guards (see review correctness notes) ---
    if batch_chunks > 1:
        # Block shapes no longer equal the full array dims, so the second-minor
        # block dims must be multiples of 8.
        assert (Bc * L) % 8 == 0, "Bc*L must be a multiple of 8 when batch_chunks > 1"
        assert (Bc * H) % 8 == 0, "Bc*H must be a multiple of 8 when batch_chunks > 1"
    if Bc > 1:
        # In-kernel reshapes (Bc*L,H)->(Bc,L,H) and (Bc,H,H)->(Bc*H,H) must not
        # split sublane tiles.
        assert L % 8 == 0, "seq_len must be a multiple of 8 when a chunk holds >1 batch element"
        assert H % 8 == 0, "hidden_dim must be a multiple of 8 when a chunk holds >1 batch element"

    # --- Pack the 8 original operands into 3 slabs (fewer, larger DMAs) ---
    # Activations: [k | q] along the feature axis -> (mb*L, 2E).
    k2 = k.reshape(mb * L, E)
    q2 = q.reshape(mb * L, E)
    x2 = jnp.concatenate([k2, q2], axis=1)

    # Weights: block-diagonal (Wk^T, Wq^T) stacked above Wp^T (zero-padded to a
    # common width).  Built in the wrapper (XLA folds/fuses it; in a real model
    # pack once outside the step function).
    Wcols = max(2 * H, O)
    w_slab = jnp.zeros((2 * E + H, Wcols), jnp.float32)
    w_slab = w_slab.at[:E, :H].set(wk_t)
    w_slab = w_slab.at[E:2 * E, H:2 * H].set(wq_t)
    w_slab = w_slab.at[2 * E:, :O].set(wp_t)

    # Biases: [bk | bq | bp] -> (1, 2H + O).
    b_slab = jnp.concatenate([bk, bq, bp], axis=1)

    kernel = functools.partial(_attention_kernel, seq_len=L, embed_dim=E,
                               hidden_dim=H, out_dim=O)

    out2, score2 = pl.pallas_call(
        kernel,
        out_shape=(
            jax.ShapeDtypeStruct((mb * L, O), jnp.float32),
            jax.ShapeDtypeStruct((mb * H, H), jnp.float32),
        ),
        grid=(batch_chunks,),
        in_specs=[
            pl.BlockSpec((Bc * L, 2 * E), lambda c: (c, 0)),        # [k|q] rows
            pl.BlockSpec((2 * E + H, Wcols), lambda c: (0, 0)),     # weight slab (resident)
            pl.BlockSpec((1, 2 * H + O), lambda c: (0, 0)),         # bias slab (resident)
        ],
        out_specs=(
            pl.BlockSpec((Bc * L, O), lambda c: (c, 0)),
            pl.BlockSpec((Bc * H, H), lambda c: (c, 0)),
        ),
        compiler_params=pltpu.CompilerParams(dimension_semantics=("parallel",)),
    )(x2, w_slab, b_slab)

    return out2.reshape(mb, L, O), score2.reshape(mb, H, H)


def make_params(key, embed_dim, hidden_dim, out_dim):
    """Deterministic nn.Linear-style init: U(-1/sqrt(fan_in), 1/sqrt(fan_in))."""
    ks = jax.random.split(key, 6)

    def linear(kw, kb, fan_in, fan_out):
        bound = 1.0 / math.sqrt(fan_in)
        w_t = jax.random.uniform(kw, (fan_in, fan_out), jnp.float32, -bound, bound)
        b = jax.random.uniform(kb, (1, fan_out), jnp.float32, -bound, bound)
        return w_t, b

    wk_t, bk = linear(ks[0], ks[1], embed_dim, hidden_dim)      # w_k
    wq_t, bq = linear(ks[2], ks[3], embed_dim, hidden_dim)      # w_q
    wp_t, bp = linear(ks[4], ks[5], hidden_dim, out_dim)        # proj
    # TODO(synk): 'mlp' / 'bi_linear' score weights unused by this forward; not created.
    return (wk_t, bk, wq_t, bq, wp_t, bp)


def attention_reference(k, q, params):
    """Plain-JAX reference mirroring the torch code (n_head=1, dot_product)."""
    wk_t, bk, wq_t, bq, wp_t, bp = params
    kx = k @ wk_t + bk                           # (B, L, H)
    qx = q @ wq_t + bq                           # (B, L, H)
    kt = jnp.swapaxes(kx, 1, 2)                  # (B, H, L)
    score = jax.nn.softmax(kt @ qx, axis=-1)     # (B, H, H)
    out = kx @ score                             # (B, L, H)
    out = out @ wp_t + bp                        # (B, L, O)
    return out, score


if __name__ == "__main__":
    # Small shapes implied by the forward: batch=2, seq=8, embed_dim=32, n_head=1
    batch, seq, embed_dim = 2, 8, 32
    hidden_dim, out_dim = embed_dim, embed_dim   # defaults when n_head=1

    root = jax.random.PRNGKey(0)
    kp, kk, kq = jax.random.split(root, 3)
    params = make_params(kp, embed_dim, hidden_dim, out_dim)

    k = jax.random.normal(kk, (batch, seq, embed_dim), jnp.float32)
    q = jax.random.normal(kq, (batch, seq, embed_dim), jnp.float32)

    out_ref, score_ref = attention_reference(k, q, params)

    # Default path: single grid step (best on v5e/v6e/v7x at this batch size).
    out, score = attention_forward(k, q, params, batch_chunks=1)
    jax.block_until_ready((out, score))
    assert out.shape == (batch, seq, out_dim)
    assert score.shape == (batch, hidden_dim, hidden_dim)
    assert jnp.allclose(score, score_ref, atol=1e-3, rtol=1e-3)
    assert jnp.allclose(out, out_ref, atol=2e-3, rtol=2e-3)

    # Batch-chunked path (exercises the grid / index_map logic; only worth
    # enabling in production once per-chunk work is in the hundreds of rows).
    out2, score2 = attention_forward(k, q, params, batch_chunks=2)
    jax.block_until_ready((out2, score2))
    assert jnp.allclose(score2, score_ref, atol=1e-3, rtol=1e-3)
    assert jnp.allclose(out2, out_ref, atol=2e-3, rtol=2e-3)

    print("KERNEL_OK")
</pallas_src>

<mosaic_0001>
module attributes {stable_mosaic.version = 11 : i64} {
  func.func @_attention_kernel(%arg0: i32, %arg1: memref<16x64xf32, #tpu.memory_space<vmem>>, %arg2: memref<96x64xf32, #tpu.memory_space<vmem>>, %arg3: memref<1x96xf32, #tpu.memory_space<vmem>>, %arg4: memref<16x32xf32, #tpu.memory_space<vmem>>, %arg5: memref<64x32xf32, #tpu.memory_space<vmem>>) attributes {dimension_semantics = [#tpu.dimension_semantics<parallel>], iteration_bounds = array<i64: 1>, scalar_prefetch = 0 : i64, scratch_operands = 0 : i64, tpu.core_type = #tpu.core_type<tc>, window_params = [{transform_indices = @transform_0, window_bounds = array<i64: 16, 64>}, {pipeline_mode = #tpu.pipeline_mode<synchronous>, transform_indices = @transform_1, window_bounds = array<i64: 96, 64>}, {pipeline_mode = #tpu.pipeline_mode<synchronous>, transform_indices = @transform_2, window_bounds = array<i64: 1, 96>}, {transform_indices = @transform_3, window_bounds = array<i64: 16, 32>}, {transform_indices = @transform_4, window_bounds = array<i64: 64, 32>}]} {
    %c0 = arith.constant 0 : index
    %c0_0 = arith.constant 0 : index
    %0 = vector.load %arg2[%c0, %c0_0] : memref<96x64xf32, #tpu.memory_space<vmem>>, vector<64x64xf32>
    %c0_1 = arith.constant 0 : index
    %c0_2 = arith.constant 0 : index
    %1 = vector.load %arg3[%c0_1, %c0_2] : memref<1x96xf32, #tpu.memory_space<vmem>>, vector<1x64xf32>
    %c0_3 = arith.constant 0 : index
    %c0_4 = arith.constant 0 : index
    %2 = vector.load %arg1[%c0_3, %c0_4] : memref<16x64xf32, #tpu.memory_space<vmem>>, vector<16x64xf32>
    %cst = arith.constant dense<0.000000e+00> : vector<16x64xf32>
    %3 = tpu.matmul %2, %0, %cst {dimension_numbers = #tpu.dot_dimension_numbers<[1], [0], [0], [1], [0, 0, 1, 1], [], []>} : vector<16x64xf32>, vector<64x64xf32>, vector<16x64xf32> -> vector<16x64xf32>
    %4 = vector.broadcast %1 : vector<1x64xf32> to vector<16x64xf32>
    %5 = arith.addf %3, %4 : vector<16x64xf32>
    %6 = vector.extract_strided_slice %5 {offsets = [0, 0], sizes = [16, 32], strides = [1, 1]} : vector<16x64xf32> to vector<16x32xf32>
    %7 = vector.extract_strided_slice %5 {offsets = [0, 32], sizes = [16, 32], strides = [1, 1]} : vector<16x64xf32> to vector<16x32xf32>
    %8 = vector.shape_cast %6 : vector<16x32xf32> to vector<2x8x32xf32>
    %9 = vector.shape_cast %7 : vector<16x32xf32> to vector<2x8x32xf32>
    %cst_5 = arith.constant dense<0.000000e+00> : vector<2x32x32xf32>
    %10 = tpu.matmul %8, %9, %cst_5 {dimension_numbers = #tpu.dot_dimension_numbers<[1], [1], [2], [2], [0, 0, 0, 2, 1, 2], [0], [0]>} : vector<2x8x32xf32>, vector<2x8x32xf32>, vector<2x32x32xf32> -> vector<2x32x32xf32>
    %cst_6 = arith.constant dense<0xFF800000> : vector<2x32xf32>
    %11 = vector.multi_reduction <maximumf>, %10, %cst_6 [2] : vector<2x32x32xf32> to vector<2x32xf32>
    %12 = vector.shape_cast %11 : vector<2x32xf32> to vector<2x32x1xf32>
    %13 = vector.broadcast %12 : vector<2x32x1xf32> to vector<2x32x32xf32>
    %14 = arith.subf %10, %13 : vector<2x32x32xf32>
    %15 = math.exp %14 : vector<2x32x32xf32>
    %cst_7 = arith.constant dense<0.000000e+00> : vector<2x32xf32>
    %16 = vector.multi_reduction <add>, %15, %cst_7 [2] : vector<2x32x32xf32> to vector<2x32xf32>
    %17 = vector.shape_cast %16 : vector<2x32xf32> to vector<2x32x1xf32>
    %18 = vector.broadcast %17 : vector<2x32x1xf32> to vector<2x32x32xf32>
    %19 = arith.divf %15, %18 : vector<2x32x32xf32>
    %cst_8 = arith.constant dense<0.000000e+00> : vector<2x8x32xf32>
    %20 = tpu.matmul %8, %19, %cst_8 {dimension_numbers = #tpu.dot_dimension_numbers<[2], [1], [1], [2], [0, 0, 0, 1, 1, 2], [0], [0]>} : vector<2x8x32xf32>, vector<2x32x32xf32>, vector<2x8x32xf32> -> vector<2x8x32xf32>
    %c64 = arith.constant 64 : index
    %c0_9 = arith.constant 0 : index
    %21 = vector.load %arg2[%c64, %c0_9] : memref<96x64xf32, #tpu.memory_space<vmem>>, vector<32x32xf32>
    %c0_10 = arith.constant 0 : index
    %c64_11 = arith.constant 64 : index
    %22 = vector.load %arg3[%c0_10, %c64_11] : memref<1x96xf32, #tpu.memory_space<vmem>>, vector<1x32xf32>
    %23 = vector.shape_cast %20 : vector<2x8x32xf32> to vector<16x32xf32>
    %cst_12 = arith.constant dense<0.000000e+00> : vector<16x32xf32>
    %24 = tpu.matmul %23, %21, %cst_12 {dimension_numbers = #tpu.dot_dimension_numbers<[1], [0], [0], [1], [0, 0, 1, 1], [], []>} : vector<16x32xf32>, vector<32x32xf32>, vector<16x32xf32> -> vector<16x32xf32>
    %25 = vector.broadcast %22 : vector<1x32xf32> to vector<16x32xf32>
    %26 = arith.addf %24, %25 : vector<16x32xf32>
    %c0_13 = arith.constant 0 : index
    %c0_14 = arith.constant 0 : index
    %27 = vector.load %arg4[%c0_13, %c0_14] : memref<16x32xf32, #tpu.memory_space<vmem>>, vector<16x32xf32>
    tpu.vector_store %arg4[%c0_13, %c0_14], %26 {strides = array<i32>} : memref<16x32xf32, #tpu.memory_space<vmem>>, vector<16x32xf32>,
    %28 = vector.shape_cast %19 : vector<2x32x32xf32> to vector<64x32xf32>
    %c0_15 = arith.constant 0 : index
    %c0_16 = arith.constant 0 : index
    %29 = vector.load %arg5[%c0_15, %c0_16] : memref<64x32xf32, #tpu.memory_space<vmem>>, vector<64x32xf32>
    tpu.vector_store %arg5[%c0_15, %c0_16], %28 {strides = array<i32>} : memref<64x32xf32, #tpu.memory_space<vmem>>, vector<64x32xf32>,
    return
  }
  func.func @transform_0(%arg0: i32) -> (i32, i32) {
    %c0_i32 = arith.constant 0 : i32
    %c0_i32_0 = arith.constant 0 : i32
    return %arg0, %c0_i32 : i32, i32
  }
  func.func @transform_1(%arg0: i32) -> (i32, i32) {
    %c0_i32 = arith.constant 0 : i32
    %c0_i32_0 = arith.constant 0 : i32
    %c0_i32_1 = arith.constant 0 : i32
    return %c0_i32, %c0_i32_0 : i32, i32
  }
  func.func @transform_2(%arg0: i32) -> (i32, i32) {
    %c0_i32 = arith.constant 0 : i32
    %c0_i32_0 = arith.constant 0 : i32
    %c0_i32_1 = arith.constant 0 : i32
    return %c0_i32, %c0_i32_0 : i32, i32
  }
  func.func @transform_3(%arg0: i32) -> (i32, i32) {
    %c0_i32 = arith.constant 0 : i32
    %c0_i32_0 = arith.constant 0 : i32
    return %arg0, %c0_i32 : i32, i32
  }
  func.func @transform_4(%arg0: i32) -> (i32, i32) {
    %c0_i32 = arith.constant 0 : i32
    %c0_i32_0 = arith.constant 0 : i32
    return %arg0, %c0_i32 : i32, i32
  }
}

</mosaic_0001>

<llo_original>
// kernel: tpu_custom_call.1
$region0: #{tpu_custom_call.1}
  #allocation0 [shape = 'u32[]', space=smem, size = 0x4, offset = 0x4, fixed_abs, tag = 'smem constant byte address 0x4 - core index']
  #allocation1 [shape = 'u32[144,128]{1,0:T(1,128)}', space=vmem, size = 0x12000, scoped, tag = 'internal scratch']
  %s0 = inlined_call_operand.vmem [shape: f32[16,64], index: 0, kind: input, shape index: {}]
  %s1 = inlined_call_operand.vmem [shape: f32[96,64], index: 1, kind: input, shape index: {}]
  %s2 = inlined_call_operand.vmem [shape: f32[1,96], index: 2, kind: input, shape index: {}]
  %s3 = inlined_call_operand.hbm [shape: f32[16,32], index: 3, kind: output, shape index: {0}]
  %s4 = inlined_call_operand.vmem [shape: f32[64,32], index: 4, kind: output, shape index: {1}]
  %5 = xla_tuple %s3, %s4
  %s6 = sld [smem:[#allocation0]]
  $region30: #{tpu_custom_call.1} parent=0
    _
  %s8 = ssub.s32 1, %s6
  %s9 = scalar_select 0, %s8, %s6
  $region1: #{tpu_custom_call.1} parent=0
    #allocation2 [shape = 'u8[8192]{0}', space=vmem, size = 0x2000, scoped, tag = 'output window, operand 0, single buffered']
    #allocation3 [shape = 's32[1]{0}', space=sflag, size = 0x4, scoped, tag = 'scoped memory for tpu_custom_call.1']
    %10 = vsyncpa [#allocation3], 0
    // Predicated region
    $region2: #{tpu_custom_call.1} parent=1 // pred_check
      _
    $region3: #{tpu_custom_call.1} parent=1 // pred_check_branch
      %12 = sbr.rel (0) target = $region5
    $region4: #{tpu_custom_call.1} parent=1 // pred_region
      _
    $region5: #{tpu_custom_call.1} parent=1 // pred_fallthru
      _
    // Predicated region
    $region6: #{tpu_custom_call.1} parent=1 // pred_check
      _
    $region7: #{tpu_custom_call.1} parent=1 // pred_check_branch
      %14 = sbr.rel (0) target = $region9
    $region8: #{tpu_custom_call.1} parent=1 // pred_region
      _
    $region9: #{tpu_custom_call.1} parent=1 // pred_fallthru
      _
    // Predicated region
    $region10: #{tpu_custom_call.1} parent=1 // pred_check
      _
    $region11: #{tpu_custom_call.1} parent=1 // pred_check_branch
      %16 = sbr.rel (0) target = $region13
    $region12: #{tpu_custom_call.1} parent=1 // pred_region
      _
    $region13: #{tpu_custom_call.1} parent=1 // pred_fallthru
      _
    %v17 = vld [vmem:[%s1] sm:$0xff]
    %v18 = vld [vmem:[%s1 + $0x8] sm:$0xff]
    %v19 = vld [vmem:[%s1 + $0x10] sm:$0xff]
    %v20 = vld [vmem:[%s1 + $0x18] sm:$0xff]
    %v21 = vld [vmem:[%s1 + $0x20] sm:$0xff]
    %v22 = vld [vmem:[%s1 + $0x28] sm:$0xff]
    %v23 = vld [vmem:[%s1 + $0x30] sm:$0xff]
    %v24 = vld [vmem:[%s1 + $0x38] sm:$0xff]
    %v25 = vld [vmem:[%s2] sm:$0x1]
    %v26 = vld [vmem:[%s0] sm:$0xff]
    %v27 = vld [vmem:[%s0 + $0x8] sm:$0xff]
    %v29 = vlaneseq
    %v30 = vshrl.u32 %v29, 7
    %v31 = vsub.s32 0, %v30
    %v32 = vrot.slane %v25, %v31
    %vm34 = vcmask 523264
    %v36 = vsel %vm34, %v26, 0
    %v39 = vsel %vm34, %v27, 0
    %41 = vmatprep.subr.mxu0 0.0
    %42 = vmatpush1.msra.mxu0 %v17
    %43 = vmatprep.subr.mxu0 0.0
    %44 = vmatpush1.msra.mxu0 %v18
    %45 = vmatprep.subr.mxu0 0.0
    %46 = vmatpush1.msra.mxu0 %v19
    %47 = vmatprep.subr.mxu0 0.0
    %48 = vmatpush1.msra.mxu0 %v20
    %49 = vmatprep.subr.mxu0 0.0
    %50 = vmatpush1.msra.mxu0 %v21
    %51 = vmatprep.subr.mxu0 0.0
    %52 = vmatpush1.msra.mxu0 %v22
    %53 = vmatprep.subr.mxu0 0.0
    %54 = vmatpush1.msra.mxu0 %v23
    %55 = vmatprep.subr.mxu0 0.0
    %56 = vmatpush1.msra.mxu0 %v24
    %57 = vmatprep.subr.mxu0 0.0
    %58 = vmatpush1.msra.mxu0 0.0
    %59 = vmatprep.subr.mxu0 0.0
    %60 = vmatpush1.msra.mxu0 0.0
    %61 = vmatprep.subr.mxu0 0.0
    %62 = vmatpush1.msra.mxu0 0.0
    %63 = vmatprep.subr.mxu0 0.0
    %64 = vmatpush1.msra.mxu0 0.0
    %65 = vmatprep.subr.mxu0 0.0
    %66 = vmatpush1.msra.mxu0 0.0
    %67 = vmatprep.subr.mxu0 0.0
    %68 = vmatpush1.msra.mxu0 0.0
    %69 = vmatprep.subr.mxu0 0.0
    %70 = vmatpush1.msra.mxu0 0.0
    %71 = vmatprep.subr.mxu0 0.0
    %72 = vmatpush1.msra.mxu0 0.0
    %73 = vmatprep.subr.mxu0 0.0
    %74 = vmatpush1.msra.mxu0 0.0
    %75 = vmatprep.subr.mxu0 0.0
    %76 = vmatpush1.msra.mxu0 0.0
    %77 = vmatprep.subr.mxu0 0.0
    %78 = vmatpush1.msra.mxu0 0.0
    %79 = vmatprep.subr.mxu0 0.0
    %80 = vmatpush1.msra.mxu0 0.0
    %81 = vmatprep.subr.mxu0 0.0
    %82 = vmatpush1.msra.mxu0 0.0
    %83 = vmatprep.subr.mxu0 0.0
    %84 = vmatpush1.msra.mxu0 0.0
    %85 = vmatprep.subr.mxu0 0.0
    %86 = vmatpush1.msra.mxu0 0.0
    %87 = vmatprep.subr.mxu0 0.0
    %88 = vmatpush1.msra.mxu0 0.0
    %89 = vmatprep.subr.mxu0 0.0
    %90 = vmatpush1.msra.mxu0 0.0
    %91 = vmatprep.subr.mxu0 0.0
    %92 = vmatpush1.msra.mxu0 0.0
    %93 = vmatprep.subr.mxu0 0.0
    %94 = vmatpush1.msra.mxu0 0.0
    %95 = vmatprep.subr.mxu0 0.0
    %96 = vmatpush1.msra.mxu0 0.0
    %97 = vmatprep.subr.mxu0 0.0
    %98 = vmatpush1.msra.mxu0 0.0
    %99 = vmatprep.subr.mxu0 0.0
    %100 = vmatpush1.msra.mxu0 0.0
    %101 = vmatprep.subr.mxu0 0.0
    %102 = vmatpush1.msra.mxu0 0.0
    %103 = vmatprep.subr.mxu0 0.0
    %104 = vmatpush1.msra.mxu0 0.0
    %105 = vmatprep.mubr.f32.mxu0 0.0
    %106 = vmatmul.mubr.f32.gmra.mrb[0].mxu0 %v36
    %v107 = vpop.f32.mrb[0].mxu0
    %v108 = vadd.f32 %v32, %v107
    %v109 = vpop.f32.mrb[0].mxu0
    %110 = vmatprep.mubr.f32.mxu0 0.0
    %111 = vmatmul.mubr.f32.gmra.mrb[0].mxu0 %v39
    %v112 = vpop.f32.mrb[0].mxu0
    %v113 = vadd.f32 %v32, %v112
    %v114 = vpop.f32.mrb[0].mxu0
    %115 = vdwg.mxu0
    %116 = vxpose.xlu0.b32.start [1/16] %v108, 128
    %117 = vxpose.xlu0.b32.cont [2/16] 0.0, 128
    %118 = vxpose.xlu0.b32.cont [3/16] 0.0, 128
    %119 = vxpose.xlu0.b32.cont [4/16] 0.0, 128
    %120 = vxpose.xlu0.b32.cont [5/16] 0.0, 128
    %121 = vxpose.xlu0.b32.cont [6/16] 0.0, 128
    %122 = vxpose.xlu0.b32.cont [7/16] 0.0, 128
    %123 = vxpose.xlu0.b32.cont [8/16] 0.0, 128
    %124 = vxpose.xlu0.b32.cont [9/16] 0.0, 128
    %125 = vxpose.xlu0.b32.cont [10/16] 0.0, 128
    %126 = vxpose.xlu0.b32.cont [11/16] 0.0, 128
    %127 = vxpose.xlu0.b32.cont [12/16] 0.0, 128
    %128 = vxpose.xlu0.b32.cont [13/16] 0.0, 128
    %129 = vxpose.xlu0.b32.cont [14/16] 0.0, 128
    %130 = vxpose.xlu0.b32.cont [15/16] 0.0, 128
    %131 = vxpose.xlu0.b32.end [16/16] 0.0, 128
    %v132 = vpop.trf.xlu0
    %v133 = vpop.trf.xlu0
    %v134 = vpop.trf.xlu0
    %v135 = vpop.trf.xlu0
    %v136 = vpop.trf.xlu0
    %v137 = vpop.trf.xlu0
    %v138 = vpop.trf.xlu0
    %v139 = vpop.trf.xlu0
    %v140 = vpop.trf.xlu0
    %v141 = vpop.trf.xlu0
    %v142 = vpop.trf.xlu0
    %v143 = vpop.trf.xlu0
    %v144 = vpop.trf.xlu0
    %v145 = vpop.trf.xlu0
    %v146 = vpop.trf.xlu0
    %v147 = vpop.trf.xlu0
    %149 = vrot.lane.b32.xlu0 %v108, 96
    %v150 = vpop.permute.xlu0 %149
    %vm152 = vcmask 64512
    %v154 = vsel %vm152, %v132, 0
    %v157 = vsel %vm152, %v133, 0
    %v160 = vsel %vm152, %v134, 0
    %v163 = vsel %vm152, %v135, 0
    %165 = vmatprep.subr.mxu0 0.0
    %166 = vmatpush1.msra.mxu0 %v150
    %167 = vmatprep.subr.mxu0 0.0
    %168 = vmatpush1.msra.mxu0 0.0
    %169 = vmatprep.subr.mxu0 0.0
    %170 = vmatpush1.msra.mxu0 0.0
    %171 = vmatprep.subr.mxu0 0.0
    %172 = vmatpush1.msra.mxu0 0.0
    %173 = vmatprep.subr.mxu0 0.0
    %174 = vmatpush1.msra.mxu0 0.0
    %175 = vmatprep.subr.mxu0 0.0
    %176 = vmatpush1.msra.mxu0 0.0
    %177 = vmatprep.subr.mxu0 0.0
    %178 = vmatpush1.msra.mxu0 0.0
    %179 = vmatprep.subr.mxu0 0.0
    %180 = vmatpush1.msra.mxu0 0.0
    %181 = vmatprep.subr.mxu0 0.0
    %182 = vmatpush1.msra.mxu0 0.0
    %183 = vmatprep.subr.mxu0 0.0
    %184 = vmatpush1.msra.mxu0 0.0
    %185 = vmatprep.subr.mxu0 0.0
    %186 = vmatpush1.msra.mxu0 0.0
    %187 = vmatprep.subr.mxu0 0.0
    %188 = vmatpush1.msra.mxu0 0.0
    %189 = vmatprep.subr.mxu0 0.0
    %190 = vmatpush1.msra.mxu0 0.0
    %191 = vmatprep.subr.mxu0 0.0
    %192 = vmatpush1.msra.mxu0 0.0
    %193 = vmatprep.subr.mxu0 0.0
    %194 = vmatpush1.msra.mxu0 0.0
    %195 = vmatprep.subr.mxu0 0.0
    %196 = vmatpush1.msra.mxu0 0.0
    %197 = vmatprep.subr.mxu0 0.0
    %198 = vmatpush1.msra.mxu0 0.0
    %199 = vmatprep.subr.mxu0 0.0
    %200 = vmatpush1.msra.mxu0 0.0
    %201 = vmatprep.subr.mxu0 0.0
    %202 = vmatpush1.msra.mxu0 0.0
    %203 = vmatprep.subr.mxu0 0.0
    %204 = vmatpush1.msra.mxu0 0.0
    %205 = vmatprep.subr.mxu0 0.0
    %206 = vmatpush1.msra.mxu0 0.0
    %207 = vmatprep.subr.mxu0 0.0
    %208 = vmatpush1.msra.mxu0 0.0
    %209 = vmatprep.subr.mxu0 0.0
    %210 = vmatpush1.msra.mxu0 0.0
    %211 = vmatprep.subr.mxu0 0.0
    %212 = vmatpush1.msra.mxu0 0.0
    %213 = vmatprep.subr.mxu0 0.0
    %214 = vmatpush1.msra.mxu0 0.0
    %215 = vmatprep.subr.mxu0 0.0
    %216 = vmatpush1.msra.mxu0 0.0
    %217 = vmatprep.subr.mxu0 0.0
    %218 = vmatpush1.msra.mxu0 0.0
    %219 = vmatprep.subr.mxu0 0.0
    %220 = vmatpush1.msra.mxu0 0.0
    %221 = vmatprep.subr.mxu0 0.0
    %222 = vmatpush1.msra.mxu0 0.0
    %223 = vmatprep.subr.mxu0 0.0
    %224 = vmatpush1.msra.mxu0 0.0
    %225 = vmatprep.subr.mxu0 0.0
    %226 = vmatpush1.msra.mxu0 0.0
    %227 = vmatprep.subr.mxu0 0.0
    %228 = vmatpush1.msra.mxu0 0.0
    %229 = vmatprep.mubr.f32.mxu0 0.0
    %230 = vmatmul.mubr.f32.gmra.mrb[0].mxu0 %v154
    %v231 = vpop.f32.mrb[0].mxu0
    %v232 = vadd.f32 0.0, %v231
    %v233 = vpop.f32.mrb[0].mxu0
    %234 = vmatprep.mubr.f32.mxu0 0.0
    %235 = vmatmul.mubr.f32.gmra.mrb[0].mxu0 %v157
    %v236 = vpop.f32.mrb[0].mxu0
    %v237 = vadd.f32 0.0, %v236
    %v238 = vpop.f32.mrb[0].mxu0
    %239 = vmatprep.mubr.f32.mxu0 0.0
    %240 = vmatmul.mubr.f32.gmra.mrb[0].mxu0 %v160
    %v241 = vpop.f32.mrb[0].mxu0
    %v242 = vadd.f32 0.0, %v241
    %v243 = vpop.f32.mrb[0].mxu0
    %244 = vmatprep.mubr.f32.mxu0 0.0
    %245 = vmatmul.mubr.f32.gmra.mrb[0].mxu0 %v163
    %v246 = vpop.f32.mrb[0].mxu0
    %v247 = vadd.f32 0.0, %v246
    %v248 = vpop.f32.mrb[0].mxu0
    %249 = vdwg.mxu0
    %250 = vxpose.xlu0.b32.start [1/16] %v113, 128
    %251 = vxpose.xlu0.b32.cont [2/16] 0.0, 128
    %252 = vxpose.xlu0.b32.cont [3/16] 0.0, 128
    %253 = vxpose.xlu0.b32.cont [4/16] 0.0, 128
    %254 = vxpose.xlu0.b32.cont [5/16] 0.0, 128
    %255 = vxpose.xlu0.b32.cont [6/16] 0.0, 128
    %256 = vxpose.xlu0.b32.cont [7/16] 0.0, 128
    %257 = vxpose.xlu0.b32.cont [8/16] 0.0, 128
    %258 = vxpose.xlu0.b32.cont [9/16] 0.0, 128
    %259 = vxpose.xlu0.b32.cont [10/16] 0.0, 128
    %260 = vxpose.xlu0.b32.cont [11/16] 0.0, 128
    %261 = vxpose.xlu0.b32.cont [12/16] 0.0, 128
    %262 = vxpose.xlu0.b32.cont [13/16] 0.0, 128
    %263 = vxpose.xlu0.b32.cont [14/16] 0.0, 128
    %264 = vxpose.xlu0.b32.cont [15/16] 0.0, 128
    %265 = vxpose.xlu0.b32.end [16/16] 0.0, 128
    %v266 = vpop.trf.xlu0
    %v267 = vpop.trf.xlu0
    %v268 = vpop.trf.xlu0
    %v269 = vpop.trf.xlu0
    %v270 = vpop.trf.xlu0
    %v271 = vpop.trf.xlu0
    %v272 = vpop.trf.xlu0
    %v273 = vpop.trf.xlu0
    %v274 = vpop.trf.xlu0
    %v275 = vpop.trf.xlu0
    %v276 = vpop.trf.xlu0
    %v277 = vpop.trf.xlu0
    %v278 = vpop.trf.xlu0
    %v279 = vpop.trf.xlu0
    %v280 = vpop.trf.xlu0
    %v281 = vpop.trf.xlu0
    %283 = vrot.lane.b32.xlu0 %v113, 96
    %v284 = vpop.permute.xlu0 %283
    %v287 = vsel %vm152, %v266, 0
    %v290 = vsel %vm152, %v267, 0
    %v293 = vsel %vm152, %v268, 0
    %v296 = vsel %vm152, %v269, 0
    %298 = vmatprep.subr.mxu0 0.0
    %299 = vmatpush1.msra.mxu0 %v284
    %300 = vmatprep.subr.mxu0 0.0
    %301 = vmatpush1.msra.mxu0 0.0
    %302 = vmatprep.subr.mxu0 0.0
    %303 = vmatpush1.msra.mxu0 0.0
    %304 = vmatprep.subr.mxu0 0.0
    %305 = vmatpush1.msra.mxu0 0.0
    %306 = vmatprep.subr.mxu0 0.0
    %307 = vmatpush1.msra.mxu0 0.0
    %308 = vmatprep.subr.mxu0 0.0
    %309 = vmatpush1.msra.mxu0 0.0
    %310 = vmatprep.subr.mxu0 0.0
    %311 = vmatpush1.msra.mxu0 0.0
    %312 = vmatprep.subr.mxu0 0.0
    %313 = vmatpush1.msra.mxu0 0.0
    %314 = vmatprep.subr.mxu0 0.0
    %315 = vmatpush1.msra.mxu0 0.0
    %316 = vmatprep.subr.mxu0 0.0
    %317 = vmatpush1.msra.mxu0 0.0
    %318 = vmatprep.subr.mxu0 0.0
    %319 = vmatpush1.msra.mxu0 0.0
    %320 = vmatprep.subr.mxu0 0.0
    %321 = vmatpush1.msra.mxu0 0.0
    %322 = vmatprep.subr.mxu0 0.0
    %323 = vmatpush1.msra.mxu0 0.0
    %324 = vmatprep.subr.mxu0 0.0
    %325 = vmatpush1.msra.mxu0 0.0
    %326 = vmatprep.subr.mxu0 0.0
    %327 = vmatpush1.msra.mxu0 0.0
    %328 = vmatprep.subr.mxu0 0.0
    %329 = vmatpush1.msra.mxu0 0.0
    %330 = vmatprep.subr.mxu0 0.0
    %331 = vmatpush1.msra.mxu0 0.0
    %332 = vmatprep.subr.mxu0 0.0
    %333 = vmatpush1.msra.mxu0 0.0
    %334 = vmatprep.subr.mxu0 0.0
    %335 = vmatpush1.msra.mxu0 0.0
    %336 = vmatprep.subr.mxu0 0.0
    %337 = vmatpush1.msra.mxu0 0.0
    %338 = vmatprep.subr.mxu0 0.0
    %339 = vmatpush1.msra.mxu0 0.0
    %340 = vmatprep.subr.mxu0 0.0
    %341 = vmatpush1.msra.mxu0 0.0
    %342 = vmatprep.subr.mxu0 0.0
    %343 = vmatpush1.msra.mxu0 0.0
    %344 = vmatprep.subr.mxu0 0.0
    %345 = vmatpush1.msra.mxu0 0.0
    %346 = vmatprep.subr.mxu0 0.0
    %347 = vmatpush1.msra.mxu0 0.0
    %348 = vmatprep.subr.mxu0 0.0
    %349 = vmatpush1.msra.mxu0 0.0
    %350 = vmatprep.subr.mxu0 0.0
    %351 = vmatpush1.msra.mxu0 0.0
    %352 = vmatprep.subr.mxu0 0.0
    %353 = vmatpush1.msra.mxu0 0.0
    %354 = vmatprep.subr.mxu0 0.0
    %355 = vmatpush1.msra.mxu0 0.0
    %356 = vmatprep.subr.mxu0 0.0
    %357 = vmatpush1.msra.mxu0 0.0
    %358 = vmatprep.subr.mxu0 0.0
    %359 = vmatpush1.msra.mxu0 0.0
    %360 = vmatprep.subr.mxu0 0.0
    %361 = vmatpush1.msra.mxu0 0.0
    %362 = vmatprep.mubr.f32.mxu0 0.0
    %363 = vmatmul.mubr.f32.gmra.mrb[0].mxu0 %v287
    %v364 = vpop.f32.mrb[0].mxu0
    %v365 = vadd.f32 0.0, %v364
    %v366 = vpop.f32.mrb[0].mxu0
    %367 = vmatprep.mubr.f32.mxu0 0.0
    %368 = vmatmul.mubr.f32.gmra.mrb[0].mxu0 %v290
    %v369 = vpop.f32.mrb[0].mxu0
    %v370 = vadd.f32 0.0, %v369
    %v371 = vpop.f32.mrb[0].mxu0
    %372 = vmatprep.mubr.f32.mxu0 0.0
    %373 = vmatmul.mubr.f32.gmra.mrb[0].mxu0 %v293
    %v374 = vpop.f32.mrb[0].mxu0
    %v375 = vadd.f32 0.0, %v374
    %v376 = vpop.f32.mrb[0].mxu0
    %377 = vmatprep.mubr.f32.mxu0 0.0
    %378 = vmatmul.mubr.f32.gmra.mrb[0].mxu0 %v296
    %v379 = vpop.f32.mrb[0].mxu0
    %v380 = vadd.f32 0.0, %v379
    %v381 = vpop.f32.mrb[0].mxu0
    %382 = vdwg.mxu0
    %vm383 = vcmask 261120
    %v384 = vsel %vm383, %v232, -inf
    %385 = vmax.xlane.f32.xlu0 %v384
    %v386 = vpop.xlane.xlu0 %385
    %v387 = vsel %vm383, %v237, -inf
    %388 = vmax.xlane.f32.xlu0 %v387
    %v389 = vpop.xlane.xlu0 %388
    %v390 = vsel %vm383, %v242, -inf
    %391 = vmax.xlane.f32.xlu0 %v390
    %v392 = vpop.xlane.xlu0 %391
    %v393 = vsel %vm383, %v247, -inf
    %394 = vmax.xlane.f32.xlu0 %v393
    %v395 = vpop.xlane.xlu0 %394
    %v396 = vsel %vm383, %v365, -inf
    %397 = vmax.xlane.f32.xlu0 %v396
    %v398 = vpop.xlane.xlu0 %397
    %v399 = vsel %vm383, %v370, -inf
    %400 = vmax.xlane.f32.xlu0 %v399
    %v401 = vpop.xlane.xlu0 %400
    %v402 = vsel %vm383, %v375, -inf
    %403 = vmax.xlane.f32.xlu0 %v402
    %v404 = vpop.xlane.xlu0 %403
    %v405 = vsel %vm383, %v380, -inf
    %406 = vmax.xlane.f32.xlu0 %v405
    %v407 = vpop.xlane.xlu0 %406
    %v408 = vsub.f32 %v232, %v386
    %v409 = vsub.f32 %v237, %v389
    %v410 = vsub.f32 %v242, %v392
    %v411 = vsub.f32 %v247, %v395
    %v412 = vsub.f32 %v365, %v398
    %v413 = vsub.f32 %v370, %v401
    %v414 = vsub.f32 %v375, %v404
    %v415 = vsub.f32 %v380, %v407
    %v416 = vmul.f32 %v408, 1.442695
    %v417 = vpow.pop %v416
    %v418 = vmul.f32 %v409, 1.442695
    %v419 = vpow.pop %v418
    %v420 = vmul.f32 %v410, 1.442695
    %v421 = vpow.pop %v420
    %v422 = vmul.f32 %v411, 1.442695
    %v423 = vpow.pop %v422
    %v424 = vmul.f32 %v412, 1.442695
    %v425 = vpow.pop %v424
    %v426 = vmul.f32 %v413, 1.442695
    %v427 = vpow.pop %v426
    %v428 = vmul.f32 %v414, 1.442695
    %v429 = vpow.pop %v428
    %v430 = vmul.f32 %v415, 1.442695
    %v431 = vpow.pop %v430
    %v432 = vsel %vm383, %v417, 0.0
    %433 = vadd.xlane.f32.xlu0 %v432
    %v434 = vpop.xlane.xlu0 %433
    %v435 = vsel %vm383, %v419, 0.0
    %436 = vadd.xlane.f32.xlu0 %v435
    %v437 = vpop.xlane.xlu0 %436
    %v438 = vsel %vm383, %v421, 0.0
    %439 = vadd.xlane.f32.xlu0 %v438
    %v440 = vpop.xlane.xlu0 %439
    %v441 = vsel %vm383, %v423, 0.0
    %442 = vadd.xlane.f32.xlu0 %v441
    %v443 = vpop.xlane.xlu0 %442
    %v444 = vsel %vm383, %v425, 0.0
    %445 = vadd.xlane.f32.xlu0 %v444
    %v446 = vpop.xlane.xlu0 %445
    %v447 = vsel %vm383, %v427, 0.0
    %448 = vadd.xlane.f32.xlu0 %v447
    %v449 = vpop.xlane.xlu0 %448
    %v450 = vsel %vm383, %v429, 0.0
    %451 = vadd.xlane.f32.xlu0 %v450
    %v452 = vpop.xlane.xlu0 %451
    %v453 = vsel %vm383, %v431, 0.0
    %454 = vadd.xlane.f32.xlu0 %v453
    %v455 = vpop.xlane.xlu0 %454
    %v456 = vrcp.pop %v434
    %v457 = vmul.f32 %v417, %v456
    %v458 = vrcp.pop %v437
    %v459 = vmul.f32 %v419, %v458
    %v460 = vrcp.pop %v440
    %v461 = vmul.f32 %v421, %v460
    %v462 = vrcp.pop %v443
    %v463 = vmul.f32 %v423, %v462
    %v464 = vrcp.pop %v446
    %v465 = vmul.f32 %v425, %v464
    %v466 = vrcp.pop %v449
    %v467 = vmul.f32 %v427, %v466
    %v468 = vrcp.pop %v452
    %v469 = vmul.f32 %v429, %v468
    %v470 = vrcp.pop %v455
    %v471 = vmul.f32 %v431, %v470
    %v472 = vsel %vm383, %v108, 0
    %474 = vmatprep.subr.mxu0 0.0
    %475 = vmatpush1.msra.mxu0 %v457
    %476 = vmatprep.subr.mxu0 0.0
    %477 = vmatpush1.msra.mxu0 %v459
    %478 = vmatprep.subr.mxu0 0.0
    %479 = vmatpush1.msra.mxu0 %v461
    %480 = vmatprep.subr.mxu0 0.0
    %481 = vmatpush1.msra.mxu0 %v463
    %482 = vmatprep.subr.mxu0 0.0
    %483 = vmatpush1.msra.mxu0 0.0
    %484 = vmatprep.subr.mxu0 0.0
    %485 = vmatpush1.msra.mxu0 0.0
    %486 = vmatprep.subr.mxu0 0.0
    %487 = vmatpush1.msra.mxu0 0.0
    %488 = vmatprep.subr.mxu0 0.0
    %489 = vmatpush1.msra.mxu0 0.0
    %490 = vmatprep.subr.mxu0 0.0
    %491 = vmatpush1.msra.mxu0 0.0
    %492 = vmatprep.subr.mxu0 0.0
    %493 = vmatpush1.msra.mxu0 0.0
    %494 = vmatprep.subr.mxu0 0.0
    %495 = vmatpush1.msra.mxu0 0.0
    %496 = vmatprep.subr.mxu0 0.0
    %497 = vmatpush1.msra.mxu0 0.0
    %498 = vmatprep.subr.mxu0 0.0
    %499 = vmatpush1.msra.mxu0 0.0
    %500 = vmatprep.subr.mxu0 0.0
    %501 = vmatpush1.msra.mxu0 0.0
    %502 = vmatprep.subr.mxu0 0.0
    %503 = vmatpush1.msra.mxu0 0.0
    %504 = vmatprep.subr.mxu0 0.0
    %505 = vmatpush1.msra.mxu0 0.0
    %506 = vmatprep.subr.mxu0 0.0
    %507 = vmatpush1.msra.mxu0 0.0
    %508 = vmatprep.subr.mxu0 0.0
    %509 = vmatpush1.msra.mxu0 0.0
    %510 = vmatprep.subr.mxu0 0.0
    %511 = vmatpush1.msra.mxu0 0.0
    %512 = vmatprep.subr.mxu0 0.0
    %513 = vmatpush1.msra.mxu0 0.0
    %514 = vmatprep.subr.mxu0 0.0
    %515 = vmatpush1.msra.mxu0 0.0
    %516 = vmatprep.subr.mxu0 0.0
    %517 = vmatpush1.msra.mxu0 0.0
    %518 = vmatprep.subr.mxu0 0.0
    %519 = vmatpush1.msra.mxu0 0.0
    %520 = vmatprep.subr.mxu0 0.0
    %521 = vmatpush1.msra.mxu0 0.0
    %522 = vmatprep.subr.mxu0 0.0
    %523 = vmatpush1.msra.mxu0 0.0
    %524 = vmatprep.subr.mxu0 0.0
    %525 = vmatpush1.msra.mxu0 0.0
    %526 = vmatprep.subr.mxu0 0.0
    %527 = vmatpush1.msra.mxu0 0.0
    %528 = vmatprep.subr.mxu0 0.0
    %529 = vmatpush1.msra.mxu0 0.0
    %530 = vmatprep.subr.mxu0 0.0
    %531 = vmatpush1.msra.mxu0 0.0
    %532 = vmatprep.subr.mxu0 0.0
    %533 = vmatpush1.msra.mxu0 0.0
    %534 = vmatprep.subr.mxu0 0.0
    %535 = vmatpush1.msra.mxu0 0.0
    %536 = vmatprep.subr.mxu0 0.0
    %537 = vmatpush1.msra.mxu0 0.0
    %538 = vmatprep.mubr.f32.mxu0 0.0
    %539 = vmatmul.mubr.f32.gmra.mrb[0].mxu0 %v472
    %v540 = vpop.f32.mrb[0].mxu0
    %v541 = vadd.f32 0.0, %v540
    %v542 = vpop.f32.mrb[0].mxu0
    %543 = vdwg.mxu0
    %v544 = vsel %vm383, %v113, 0
    %546 = vmatprep.subr.mxu0 0.0
    %547 = vmatpush1.msra.mxu0 %v465
    %548 = vmatprep.subr.mxu0 0.0
    %549 = vmatpush1.msra.mxu0 %v467
    %550 = vmatprep.subr.mxu0 0.0
    %551 = vmatpush1.msra.mxu0 %v469
    %552 = vmatprep.subr.mxu0 0.0
    %553 = vmatpush1.msra.mxu0 %v471
    %554 = vmatprep.subr.mxu0 0.0
    %555 = vmatpush1.msra.mxu0 0.0
    %556 = vmatprep.subr.mxu0 0.0
    %557 = vmatpush1.msra.mxu0 0.0
    %558 = vmatprep.subr.mxu0 0.0
    %559 = vmatpush1.msra.mxu0 0.0
    %560 = vmatprep.subr.mxu0 0.0
    %561 = vmatpush1.msra.mxu0 0.0
    %562 = vmatprep.subr.mxu0 0.0
    %563 = vmatpush1.msra.mxu0 0.0
    %564 = vmatprep.subr.mxu0 0.0
    %565 = vmatpush1.msra.mxu0 0.0
    %566 = vmatprep.subr.mxu0 0.0
    %567 = vmatpush1.msra.mxu0 0.0
    %568 = vmatprep.subr.mxu0 0.0
    %569 = vmatpush1.msra.mxu0 0.0
    %570 = vmatprep.subr.mxu0 0.0
    %571 = vmatpush1.msra.mxu0 0.0
    %572 = vmatprep.subr.mxu0 0.0
    %573 = vmatpush1.msra.mxu0 0.0
    %574 = vmatprep.subr.mxu0 0.0
    %575 = vmatpush1.msra.mxu0 0.0
    %576 = vmatprep.subr.mxu0 0.0
    %577 = vmatpush1.msra.mxu0 0.0
    %578 = vmatprep.subr.mxu0 0.0
    %579 = vmatpush1.msra.mxu0 0.0
    %580 = vmatprep.subr.mxu0 0.0
    %581 = vmatpush1.msra.mxu0 0.0
    %582 = vmatprep.subr.mxu0 0.0
    %583 = vmatpush1.msra.mxu0 0.0
    %584 = vmatprep.subr.mxu0 0.0
    %585 = vmatpush1.msra.mxu0 0.0
    %586 = vmatprep.subr.mxu0 0.0
    %587 = vmatpush1.msra.mxu0 0.0
    %588 = vmatprep.subr.mxu0 0.0
    %589 = vmatpush1.msra.mxu0 0.0
    %590 = vmatprep.subr.mxu0 0.0
    %591 = vmatpush1.msra.mxu0 0.0
    %592 = vmatprep.subr.mxu0 0.0
    %593 = vmatpush1.msra.mxu0 0.0
    %594 = vmatprep.subr.mxu0 0.0
    %595 = vmatpush1.msra.mxu0 0.0
    %596 = vmatprep.subr.mxu0 0.0
    %597 = vmatpush1.msra.mxu0 0.0
    %598 = vmatprep.subr.mxu0 0.0
    %599 = vmatpush1.msra.mxu0 0.0
    %600 = vmatprep.subr.mxu0 0.0
    %601 = vmatpush1.msra.mxu0 0.0
    %602 = vmatprep.subr.mxu0 0.0
    %603 = vmatpush1.msra.mxu0 0.0
    %604 = vmatprep.subr.mxu0 0.0
    %605 = vmatpush1.msra.mxu0 0.0
    %606 = vmatprep.subr.mxu0 0.0
    %607 = vmatpush1.msra.mxu0 0.0
    %608 = vmatprep.subr.mxu0 0.0
    %609 = vmatpush1.msra.mxu0 0.0
    %610 = vmatprep.mubr.f32.mxu0 0.0
    %611 = vmatmul.mubr.f32.gmra.mrb[0].mxu0 %v544
    %v612 = vpop.f32.mrb[0].mxu0
    %v613 = vadd.f32 0.0, %v612
    %v614 = vpop.f32.mrb[0].mxu0
    %615 = vdwg.mxu0
    %v616 = vld [vmem:[%s1 + $0x40] sm:$0xff]
    %v617 = vld [vmem:[%s1 + $0x48] sm:$0xff]
    %v618 = vld [vmem:[%s1 + $0x50] sm:$0xff]
    %v619 = vld [vmem:[%s1 + $0x58] sm:$0xff]
    %620 = vrot.lane.b32.xlu0 %v32, 64
    %v621 = vpop.permute.xlu0 %620
    %v624 = vsel %vm383, %v541, 0
    %v627 = vsel %vm383, %v613, 0
    %629 = vmatprep.subr.mxu0 0.0
    %630 = vmatpush1.msra.mxu0 %v616
    %631 = vmatprep.subr.mxu0 0.0
    %632 = vmatpush1.msra.mxu0 %v617
    %633 = vmatprep.subr.mxu0 0.0
    %634 = vmatpush1.msra.mxu0 %v618
    %635 = vmatprep.subr.mxu0 0.0
    %636 = vmatpush1.msra.mxu0 %v619
    %637 = vmatprep.subr.mxu0 0.0
    %638 = vmatpush1.msra.mxu0 0.0
    %639 = vmatprep.subr.mxu0 0.0
    %640 = vmatpush1.msra.mxu0 0.0
    %641 = vmatprep.subr.mxu0 0.0
    %642 = vmatpush1.msra.mxu0 0.0
    %643 = vmatprep.subr.mxu0 0.0
    %644 = vmatpush1.msra.mxu0 0.0
    %645 = vmatprep.subr.mxu0 0.0
    %646 = vmatpush1.msra.mxu0 0.0
    %647 = vmatprep.subr.mxu0 0.0
    %648 = vmatpush1.msra.mxu0 0.0
    %649 = vmatprep.subr.mxu0 0.0
    %650 = vmatpush1.msra.mxu0 0.0
    %651 = vmatprep.subr.mxu0 0.0
    %652 = vmatpush1.msra.mxu0 0.0
    %653 = vmatprep.subr.mxu0 0.0
    %654 = vmatpush1.msra.mxu0 0.0
    %655 = vmatprep.subr.mxu0 0.0
    %656 = vmatpush1.msra.mxu0 0.0
    %657 = vmatprep.subr.mxu0 0.0
    %658 = vmatpush1.msra.mxu0 0.0
    %659 = vmatprep.subr.mxu0 0.0
    %660 = vmatpush1.msra.mxu0 0.0
    %661 = vmatprep.subr.mxu0 0.0
    %662 = vmatpush1.msra.mxu0 0.0
    %663 = vmatprep.subr.mxu0 0.0
    %664 = vmatpush1.msra.mxu0 0.0
    %665 = vmatprep.subr.mxu0 0.0
    %666 = vmatpush1.msra.mxu0 0.0
    %667 = vmatprep.subr.mxu0 0.0
    %668 = vmatpush1.msra.mxu0 0.0
    %669 = vmatprep.subr.mxu0 0.0
    %670 = vmatpush1.msra.mxu0 0.0
    %671 = vmatprep.subr.mxu0 0.0
    %672 = vmatpush1.msra.mxu0 0.0
    %673 = vmatprep.subr.mxu0 0.0
    %674 = vmatpush1.msra.mxu0 0.0
    %675 = vmatprep.subr.mxu0 0.0
    %676 = vmatpush1.msra.mxu0 0.0
    %677 = vmatprep.subr.mxu0 0.0
    %678 = vmatpush1.msra.mxu0 0.0
    %679 = vmatprep.subr.mxu0 0.0
    %680 = vmatpush1.msra.mxu0 0.0
    %681 = vmatprep.subr.mxu0 0.0
    %682 = vmatpush1.msra.mxu0 0.0
    %683 = vmatprep.subr.mxu0 0.0
    %684 = vmatpush1.msra.mxu0 0.0
    %685 = vmatprep.subr.mxu0 0.0
    %686 = vmatpush1.msra.mxu0 0.0
    %687 = vmatprep.subr.mxu0 0.0
    %688 = vmatpush1.msra.mxu0 0.0
    %689 = vmatprep.subr.mxu0 0.0
    %690 = vmatpush1.msra.mxu0 0.0
    %691 = vmatprep.subr.mxu0 0.0
    %692 = vmatpush1.msra.mxu0 0.0
    %693 = vmatprep.mubr.f32.mxu0 0.0
    %694 = vmatmul.mubr.f32.gmra.mrb[0].mxu0 %v624
    %v695 = vpop.f32.mrb[0].mxu0
    %v696 = vadd.f32 %v621, %v695
    %v697 = vpop.f32.mrb[0].mxu0
    %698 = vmatprep.mubr.f32.mxu0 0.0
    %699 = vmatmul.mubr.f32.gmra.mrb[0].mxu0 %v627
    %v700 = vpop.f32.mrb[0].mxu0
    %v701 = vadd.f32 %v621, %v700
    %v702 = vpop.f32.mrb[0].mxu0
    %703 = vdwg.mxu0
    %704 = vst.msk [vmem:[#allocation2] sm:$0xff] %vm383, %v696
    %705 = vst.msk [vmem:[#allocation2 + $0x8] sm:$0xff] %vm383, %v701
    %706 = vst.msk [vmem:[%s4] sm:$0xff] %vm383, %v457
    %707 = vst.msk [vmem:[%s4 + $0x8] sm:$0xff] %vm383, %v459
    %708 = vst.msk [vmem:[%s4 + $0x10] sm:$0xff] %vm383, %v461
    %709 = vst.msk [vmem:[%s4 + $0x18] sm:$0xff] %vm383, %v463
    %710 = vst.msk [vmem:[%s4 + $0x20] sm:$0xff] %vm383, %v465
    %711 = vst.msk [vmem:[%s4 + $0x28] sm:$0xff] %vm383, %v467
    %712 = vst.msk [vmem:[%s4 + $0x30] sm:$0xff] %vm383, %v469
    %713 = vst.msk [vmem:[%s4 + $0x38] sm:$0xff] %vm383, %v471
    // Predicated region
    $region14: #{tpu_custom_call.1} parent=1 // pred_check
      _
    $region15: #{tpu_custom_call.1} parent=1 // pred_check_branch
      %715 = sbr.rel (0) target = $region17
    $region16: #{tpu_custom_call.1} parent=1 // pred_region
      %s717 = ssub.s32 256, 256
      %718 = vsyncadd [#allocation3], %s717
      %s719 = sshll.u32 [#allocation2], 4
      %s720 = int_to_ptr.vmem [resolvable:$true] %s719
      %725 = dma.vmem_to_hbm [thread:$0]  %s720, 256, %s3, [#allocation3], 128, 128, 8
    $region17: #{tpu_custom_call.1} parent=1 // pred_fallthru
      _
    // Predicated region
    $region18: #{tpu_custom_call.1} parent=1 // pred_check
      _
    $region19: #{tpu_custom_call.1} parent=1 // pred_check_branch
      %727 = sbr.rel (0) target = $region21
    $region20: #{tpu_custom_call.1} parent=1 // pred_region
      _
    $region21: #{tpu_custom_call.1} parent=1 // pred_fallthru
      _
    // Predicated region
    $region22: #{tpu_custom_call.1} parent=1 // pred_check
      _
    $region23: #{tpu_custom_call.1} parent=1 // pred_check_branch
      %729 = sbr.rel (0) target = $region25
    $region24: #{tpu_custom_call.1} parent=1 // pred_region
      %730 = dma.done [#allocation3], 256
    $region25: #{tpu_custom_call.1} parent=1 // pred_fallthru
      _
    // Predicated region
    $region26: #{tpu_custom_call.1} parent=1 // pred_check
      _
    $region27: #{tpu_custom_call.1} parent=1 // pred_check_branch
      %732 = sbr.rel (0) target = $region29
    $region28: #{tpu_custom_call.1} parent=1 // pred_region
      _
    $region29: #{tpu_custom_call.1} parent=1 // pred_fallthru
      _
    %733 = vsyncpa [#allocation3], 1

</llo_original>
